<compile_context>
chip_gen: v5e
topology: v5e:2x2
jax: 0.10.0
libtpu: 0.0.40
codegen_flags: <defaults>
</compile_context>

<pallas_src>
import jax
import jax.numpy as jnp
from jax.experimental import pallas as pl
from jax.experimental.pallas import tpu as pltpu


def gtconv_kernel(filt_ref, a_ref, o_ref):
    # filt_ref: (C_out, C_in) softmax(weight), SMEM (scalar reads)
    # a_ref:    (C_in, TILE_R, N) input row-slab, VMEM (pipelined)
    # o_ref:    (C_out, TILE_R, N) output row-slab, VMEM (pipelined)
    c_out, c_in = filt_ref.shape

    # Channel-outer loop: each input channel slab is loaded from VMEM exactly
    # once (lazy per-channel read) and fanned out into C_out running f32
    # accumulators via VPU scalar*vector FMAs.
    accs = [None] * c_out
    for j in range(c_in):                          # tiny static loops
        a_j = a_ref[j].astype(jnp.float32)         # (TILE_R, N)
        for i in range(c_out):
            term = filt_ref[i, j] * a_j
            accs[i] = term if accs[i] is None else accs[i] + term

    # Dense (TILE_R, N) slab stores (no single-sublane masked stores).
    for i in range(c_out):
        o_ref[i] = accs[i].astype(o_ref.dtype)


def _pick_row_tile(n_rows, n_cols, c_in, c_out, target_step_bytes, vmem_budget_bytes):
    """Rows per block: ~target_step_bytes of real data per grid step, capped by
    a VMEM budget; prefers exact divisors of n_rows, then even grid counts."""
    c_total = c_in + c_out
    bytes_per_row_per_chan = n_cols * 4

    # Per-step real data: (C_in + C_out) * TILE_R * N * 4 bytes.
    ideal = max(8, target_step_bytes // (c_total * bytes_per_row_per_chan))

    # VMEM: double-buffered in/out blocks plus (C_out + 1) in-kernel f32 slabs.
    slabs = 2 * c_total + c_out + 1
    cap = max(8, vmem_budget_bytes // (slabs * bytes_per_row_per_chan))

    tile = max(8, (min(ideal, cap) // 8) * 8)
    if tile >= n_rows:
        return n_rows  # full row dim: no 8-alignment constraint when full.

    lo = max(8, (tile // 2 // 8) * 8)
    # 1) largest exact multiple-of-8 divisor near the target (no partial block)
    for cand in range(tile, lo - 1, -8):
        if n_rows % cand == 0:
            return cand
    # 2) else prefer an even grid count (v7x: two TensorCores share 'parallel')
    for cand in range(tile, lo - 1, -8):
        if (-(-n_rows // cand)) % 2 == 0:
            return cand
    # 3) else accept a masked partial last block at the target size.
    return tile


def gtconv_forward(weight, A_dense, *, target_step_bytes=3 << 20,
                   vmem_budget_bytes=12 << 20, small_problem_fallback=True):
    """weight: (C_out, C_in); A_dense: (C_in, N, N) -> (C_out, N, N) float32."""
    c_out, c_in = weight.shape
    c_in2, n, n2 = A_dense.shape
    assert c_in == c_in2 and n == n2

    # Hoisted softmax over in_channels (dim=1): computed once in the wrapper.
    filt = jax.nn.softmax(weight.astype(jnp.float32), axis=1)
    A_f32 = A_dense.astype(jnp.float32)

    if small_problem_fallback and n * n < 64 * 1024:
        # Launch + grid-step overhead dwarfs ~KBs of useful work; let XLA fuse.
        return jnp.einsum("oc,cnm->onm", filt, A_f32)

    tile_r = _pick_row_tile(n, n, c_in, c_out, target_step_bytes, vmem_budget_bytes)
    grid = (pl.cdiv(n, tile_r),)

    cost = pl.CostEstimate(
        flops=2 * c_out * c_in * n * n,
        transcendentals=0,
        bytes_accessed=(c_in + c_out) * n * n * 4 + c_out * c_in * 4,
    )

    return pl.pallas_call(
        gtconv_kernel,
        out_shape=jax.ShapeDtypeStruct((c_out, n, n), jnp.float32),
        grid_spec=pltpu.PrefetchScalarGridSpec(
            num_scalar_prefetch=0,
            grid=grid,
            in_specs=[
                # softmaxed filter: tiny, lives in SMEM, read as scalars.
                pl.BlockSpec(memory_space=pltpu.MemorySpace.SMEM),
                # one sublane-dense row-slab of all input channels (VMEM).
                pl.BlockSpec((c_in, tile_r, n), lambda t: (0, t, 0)),
            ],
            out_specs=pl.BlockSpec((c_out, tile_r, n), lambda t: (0, t, 0)),
        ),
        compiler_params=pltpu.CompilerParams(
            dimension_semantics=("parallel",),
        ),
        cost_estimate=cost,
    )(filt, A_f32)


def _make_inputs(key, in_channels, out_channels, num_nodes, density=0.3):
    k_w, k_a, k_m = jax.random.split(key, 3)
    # nn.init.normal_(weight, std=0.01)
    weight = 0.01 * jax.random.normal(
        k_w, (out_channels, in_channels), dtype=jnp.float32
    )
    vals = jax.random.uniform(
        k_a, (in_channels, num_nodes, num_nodes), dtype=jnp.float32
    )
    mask = jax.random.uniform(k_m, (in_channels, num_nodes, num_nodes)) < density
    A_dense = jnp.where(mask, vals, 0.0).astype(jnp.float32)
    return weight, A_dense


if __name__ == "__main__":
    key = jax.random.PRNGKey(0)
    k1, k2 = jax.random.split(key)

    # Case 1: shapes consistent with the module: 4 edge types, 2 output
    # channels, 16 nodes.  Fallback disabled so the Pallas kernel is run.
    in_channels, out_channels, num_nodes = 4, 2, 16
    w1, A1 = _make_inputs(k1, in_channels, out_channels, num_nodes)
    out1 = gtconv_forward(w1, A1, small_problem_fallback=False)
    out1 = jax.block_until_ready(out1)
    ref1 = jnp.einsum("oc,cnm->onm", jax.nn.softmax(w1, axis=1), A1)
    assert out1.shape == (out_channels, num_nodes, num_nodes)
    assert jnp.allclose(out1, ref1, atol=1e-5, rtol=1e-5)

    # Case 2: non-128-aligned node count with a multi-step row-tiled grid
    # (small target_step_bytes forces several grid steps) to exercise the
    # tiling path; still small enough to run instantly.
    n2 = 200
    w2, A2 = _make_inputs(k2, in_channels, out_channels, n2)
    out2 = gtconv_forward(
        w2, A2, small_problem_fallback=False, target_step_bytes=256 * 1024
    )
    out2 = jax.block_until_ready(out2)
    ref2 = jnp.einsum("oc,cnm->onm", jax.nn.softmax(w2, axis=1), A2)
    assert out2.shape == (out_channels, n2, n2)
    assert jnp.allclose(out2, ref2, atol=1e-5, rtol=1e-5)

    # TODO(synk): the original module emits coalesced sparse COO (edge_index,
    # edge_value) per output channel via torch_sparse.coalesce; the equivalent
    # dense adjacency (C_out, N, N) is returned here instead.
    print("KERNEL_OK")
</pallas_src>

<mosaic_0001>
module attributes {stable_mosaic.version = 11 : i64} {
  func.func @gtconv_kernel(%arg0: i32, %arg1: memref<2x4xf32, #tpu.memory_space<smem>>, %arg2: memref<4x16x16xf32, #tpu.memory_space<vmem>>, %arg3: memref<2x16x16xf32, #tpu.memory_space<vmem>>) attributes {dimension_semantics = [#tpu.dimension_semantics<parallel>], iteration_bounds = array<i64: 1>, scalar_prefetch = 0 : i64, scratch_operands = 0 : i64, tpu.core_type = #tpu.core_type<tc>, window_params = [{transform_indices = @transform_0, window_bounds = array<i64: 2, 4>}, {transform_indices = @transform_1, window_bounds = array<i64: 4, 16, 16>}, {transform_indices = @transform_2, window_bounds = array<i64: 2, 16, 16>}]} {
    %c0 = arith.constant 0 : index
    %c0_0 = arith.constant 0 : index
    %c0_1 = arith.constant 0 : index
    %0 = vector.load %arg2[%c0, %c0_0, %c0_1] : memref<4x16x16xf32, #tpu.memory_space<vmem>>, vector<1x16x16xf32>
    %1 = vector.shape_cast %0 : vector<1x16x16xf32> to vector<16x16xf32>
    %c0_2 = arith.constant 0 : index
    %c0_3 = arith.constant 0 : index
    %2 = memref.load %arg1[%c0_2, %c0_3] : memref<2x4xf32, #tpu.memory_space<smem>>
    %3 = vector.broadcast %2 : f32 to vector<16x16xf32>
    %4 = arith.mulf %3, %1 : vector<16x16xf32>
    %c1 = arith.constant 1 : index
    %c0_4 = arith.constant 0 : index
    %5 = memref.load %arg1[%c1, %c0_4] : memref<2x4xf32, #tpu.memory_space<smem>>
    %6 = vector.broadcast %5 : f32 to vector<16x16xf32>
    %7 = arith.mulf %6, %1 : vector<16x16xf32>
    %c1_5 = arith.constant 1 : index
    %c0_6 = arith.constant 0 : index
    %c0_7 = arith.constant 0 : index
    %8 = vector.load %arg2[%c1_5, %c0_6, %c0_7] : memref<4x16x16xf32, #tpu.memory_space<vmem>>, vector<1x16x16xf32>
    %9 = vector.shape_cast %8 : vector<1x16x16xf32> to vector<16x16xf32>
    %c0_8 = arith.constant 0 : index
    %c1_9 = arith.constant 1 : index
    %10 = memref.load %arg1[%c0_8, %c1_9] : memref<2x4xf32, #tpu.memory_space<smem>>
    %11 = vector.broadcast %10 : f32 to vector<16x16xf32>
    %12 = arith.mulf %11, %9 : vector<16x16xf32>
    %13 = arith.addf %4, %12 : vector<16x16xf32>
    %c1_10 = arith.constant 1 : index
    %c1_11 = arith.constant 1 : index
    %14 = memref.load %arg1[%c1_10, %c1_11] : memref<2x4xf32, #tpu.memory_space<smem>>
    %15 = vector.broadcast %14 : f32 to vector<16x16xf32>
    %16 = arith.mulf %15, %9 : vector<16x16xf32>
    %17 = arith.addf %7, %16 : vector<16x16xf32>
    %c2 = arith.constant 2 : index
    %c0_12 = arith.constant 0 : index
    %c0_13 = arith.constant 0 : index
    %18 = vector.load %arg2[%c2, %c0_12, %c0_13] : memref<4x16x16xf32, #tpu.memory_space<vmem>>, vector<1x16x16xf32>
    %19 = vector.shape_cast %18 : vector<1x16x16xf32> to vector<16x16xf32>
    %c0_14 = arith.constant 0 : index
    %c2_15 = arith.constant 2 : index
    %20 = memref.load %arg1[%c0_14, %c2_15] : memref<2x4xf32, #tpu.memory_space<smem>>
    %21 = vector.broadcast %20 : f32 to vector<16x16xf32>
    %22 = arith.mulf %21, %19 : vector<16x16xf32>
    %23 = arith.addf %13, %22 : vector<16x16xf32>
    %c1_16 = arith.constant 1 : index
    %c2_17 = arith.constant 2 : index
    %24 = memref.load %arg1[%c1_16, %c2_17] : memref<2x4xf32, #tpu.memory_space<smem>>
    %25 = vector.broadcast %24 : f32 to vector<16x16xf32>
    %26 = arith.mulf %25, %19 : vector<16x16xf32>
    %27 = arith.addf %17, %26 : vector<16x16xf32>
    %c3 = arith.constant 3 : index
    %c0_18 = arith.constant 0 : index
    %c0_19 = arith.constant 0 : index
    %28 = vector.load %arg2[%c3, %c0_18, %c0_19] : memref<4x16x16xf32, #tpu.memory_space<vmem>>, vector<1x16x16xf32>
    %29 = vector.shape_cast %28 : vector<1x16x16xf32> to vector<16x16xf32>
    %c0_20 = arith.constant 0 : index
    %c3_21 = arith.constant 3 : index
    %30 = memref.load %arg1[%c0_20, %c3_21] : memref<2x4xf32, #tpu.memory_space<smem>>
    %31 = vector.broadcast %30 : f32 to vector<16x16xf32>
    %32 = arith.mulf %31, %29 : vector<16x16xf32>
    %33 = arith.addf %23, %32 : vector<16x16xf32>
    %c1_22 = arith.constant 1 : index
    %c3_23 = arith.constant 3 : index
    %34 = memref.load %arg1[%c1_22, %c3_23] : memref<2x4xf32, #tpu.memory_space<smem>>
    %35 = vector.broadcast %34 : f32 to vector<16x16xf32>
    %36 = arith.mulf %35, %29 : vector<16x16xf32>
    %37 = arith.addf %27, %36 : vector<16x16xf32>
    %c0_24 = arith.constant 0 : index
    %c0_25 = arith.constant 0 : index
    %c0_26 = arith.constant 0 : index
    %38 = vector.load %arg3[%c0_24, %c0_25, %c0_26] : memref<2x16x16xf32, #tpu.memory_space<vmem>>, vector<1x16x16xf32>
    %39 = vector.shape_cast %38 : vector<1x16x16xf32> to vector<16x16xf32>
    %40 = vector.shape_cast %33 : vector<16x16xf32> to vector<1x16x16xf32>
    tpu.vector_store %arg3[%c0_24, %c0_25, %c0_26], %40 {strides = array<i32>} : memref<2x16x16xf32, #tpu.memory_space<vmem>>, vector<1x16x16xf32>,
    %c1_27 = arith.constant 1 : index
    %c0_28 = arith.constant 0 : index
    %c0_29 = arith.constant 0 : index
    %41 = vector.load %arg3[%c1_27, %c0_28, %c0_29] : memref<2x16x16xf32, #tpu.memory_space<vmem>>, vector<1x16x16xf32>
    %42 = vector.shape_cast %41 : vector<1x16x16xf32> to vector<16x16xf32>
    %43 = vector.shape_cast %37 : vector<16x16xf32> to vector<1x16x16xf32>
    tpu.vector_store %arg3[%c1_27, %c0_28, %c0_29], %43 {strides = array<i32>} : memref<2x16x16xf32, #tpu.memory_space<vmem>>, vector<1x16x16xf32>,
    return
  }
  func.func @transform_0(%arg0: i32) -> (i32, i32) {
    %c0_i32 = arith.constant 0 : i32
    %c0_i32_0 = arith.constant 0 : i32
    %c0_i32_1 = arith.constant 0 : i32
    return %c0_i32, %c0_i32_0 : i32, i32
  }
  func.func @transform_1(%arg0: i32) -> (i32, i32, i32) {
    %c0_i32 = arith.constant 0 : i32
    %c0_i32_0 = arith.constant 0 : i32
    %c0_i32_1 = arith.constant 0 : i32
    return %c0_i32, %arg0, %c0_i32_0 : i32, i32, i32
  }
  func.func @transform_2(%arg0: i32) -> (i32, i32, i32) {
    %c0_i32 = arith.constant 0 : i32
    %c0_i32_0 = arith.constant 0 : i32
    %c0_i32_1 = arith.constant 0 : i32
    return %c0_i32, %arg0, %c0_i32_0 : i32, i32, i32
  }
}

</mosaic_0001>

<llo_original>
// kernel: tpu_custom_call.1
$region0: #{tpu_custom_call.1}
  #allocation0 [shape = 'u32[]', space=smem, size = 0x4, offset = 0x4, fixed_abs, tag = 'smem constant byte address 0x4 - core index']
  #allocation1 [shape = 'u32[72,128]{1,0:T(1,128)}', space=vmem, size = 0x9000, scoped, tag = 'internal scratch']
  %s0 = inlined_call_operand.hbm [shape: f32[2,4], index: 0, kind: input, shape index: {}]
  %s1 = inlined_call_operand.hbm [shape: f32[4,16,16], index: 1, kind: input, shape index: {}]
  %s2 = inlined_call_operand.hbm [shape: f32[2,16,16], index: 2, kind: output, shape index: {}]
  %s3 = sld [smem:[#allocation0]]
  $region26: #{tpu_custom_call.1} parent=0
    _
  %s5 = ssub.s32 1, %s3
  %s6 = scalar_select 0, %s5, %s3
  $region1: #{tpu_custom_call.1} parent=0
    #allocation2 [shape = 'u8[1024]{0}', space=smem, size = 0x400, scoped, tag = 'input window, operand 0, single buffered']
    #allocation3 [shape = 's32[1]{0}', space=sflag, size = 0x4, scoped, tag = 'scoped memory for tpu_custom_call.1']
    #allocation4 [shape = 's32[1]{0}', space=sflag, size = 0x4, scoped, tag = 'scoped memory for tpu_custom_call.1']
    #allocation5 [shape = 's32[1]{0}', space=sflag, size = 0x4, scoped, tag = 'scoped memory for tpu_custom_call.1']
    #allocation6 [shape = 'u8[32768]{0}', space=vmem, size = 0x8000, scoped, tag = 'input window, operand 1, single buffered']
    #allocation7 [shape = 'u8[16384]{0}', space=vmem, size = 0x4000, scoped, tag = 'output window, operand 0, single buffered']
    %7 = vsyncpa [#allocation5], 0
    %8 = vsyncpa [#allocation3], 0
    %9 = vsyncpa [#allocation4], 0
    // Predicated region
    $region2: #{tpu_custom_call.1} parent=1 // pred_check
      _
    $region3: #{tpu_custom_call.1} parent=1 // pred_check_branch
      %11 = sbr.rel (0) target = $region5
    $region4: #{tpu_custom_call.1} parent=1 // pred_region
      %13 = vsyncadd [#allocation5], 0
      %s15 = sshll.u32 %s0, 4
      %s16 = int_to_ptr.hbm [resolvable:$true] %s15
      %18 = dma.hbm_to_smem %s16, 32, [#allocation2], [#allocation5]
    $region5: #{tpu_custom_call.1} parent=1 // pred_fallthru
      _
    // Predicated region
    $region6: #{tpu_custom_call.1} parent=1 // pred_check
      _
    $region7: #{tpu_custom_call.1} parent=1 // pred_check_branch
      %20 = sbr.rel (0) target = $region9
    $region8: #{tpu_custom_call.1} parent=1 // pred_region
      %22 = vsyncadd [#allocation3], 0
      %s23 = sshll.u32 %s1, 4
      %s24 = int_to_ptr.hbm [resolvable:$true] %s23
      %s25 = sshll.u32 [#allocation6], 4
      %s26 = int_to_ptr.vmem [resolvable:$true] %s25
      %31 = dma.hbm_to_vmem [thread:$0]  %s24, 1024, %s26, [#allocation3], 128, 128, 8
    $region9: #{tpu_custom_call.1} parent=1 // pred_fallthru
      _
    // Predicated region
    $region10: #{tpu_custom_call.1} parent=1 // pred_check
      _
    $region11: #{tpu_custom_call.1} parent=1 // pred_check_branch
      %33 = sbr.rel (0) target = $region13
    $region12: #{tpu_custom_call.1} parent=1 // pred_region
      %35 = dma.done [#allocation5], 32
    $region13: #{tpu_custom_call.1} parent=1 // pred_fallthru
      _
    // Predicated region
    $region14: #{tpu_custom_call.1} parent=1 // pred_check
      _
    $region15: #{tpu_custom_call.1} parent=1 // pred_check_branch
      %37 = sbr.rel (0) target = $region17
    $region16: #{tpu_custom_call.1} parent=1 // pred_region
      %39 = dma.done [#allocation3], 1024
    $region17: #{tpu_custom_call.1} parent=1 // pred_fallthru
      _
    %40 = sfence
    %v41 = vld [vmem:[#allocation6] sm:$0xff]
    %v42 = vld [vmem:[#allocation6 + $0x8] sm:$0xff]
    %s43 = sld [smem:[#allocation2]]
    %v44 = vstv %s43
    %v45 = vmul.f32 %v44, %v41
    %v46 = vmul.f32 %v44, %v42
    %s47 = sld [smem:[#allocation2 + $0x80]]
    %v48 = vstv %s47
    %v49 = vmul.f32 %v48, %v41
    %v50 = vmul.f32 %v48, %v42
    %s51 = scalar_lea.vmem [#allocation6], 16
    %v52 = vld [vmem:[%s51] sm:$0xff]
    %v53 = vld [vmem:[%s51 + $0x8] sm:$0xff]
    %s54 = sld [smem:[#allocation2 + $0x1]]
    %v55 = vstv %s54
    %v56 = vmul.f32 %v55, %v52
    %v57 = vmul.f32 %v55, %v53
    %v58 = vadd.f32 %v45, %v56
    %v59 = vadd.f32 %v46, %v57
    %s60 = sld [smem:[#allocation2 + $0x81]]
    %v61 = vstv %s60
    %v62 = vmul.f32 %v61, %v52
    %v63 = vmul.f32 %v61, %v53
    %v64 = vadd.f32 %v49, %v62
    %v65 = vadd.f32 %v50, %v63
    %s66 = scalar_lea.vmem [#allocation6], 32
    %v67 = vld [vmem:[%s66] sm:$0xff]
    %v68 = vld [vmem:[%s66 + $0x8] sm:$0xff]
    %s69 = sld [smem:[#allocation2 + $0x2]]
    %v70 = vstv %s69
    %v71 = vmul.f32 %v70, %v67
    %v72 = vmul.f32 %v70, %v68
    %v73 = vadd.f32 %v58, %v71
    %v74 = vadd.f32 %v59, %v72
    %s75 = sld [smem:[#allocation2 + $0x82]]
    %v76 = vstv %s75
    %v77 = vmul.f32 %v76, %v67
    %v78 = vmul.f32 %v76, %v68
    %v79 = vadd.f32 %v64, %v77
    %v80 = vadd.f32 %v65, %v78
    %s81 = scalar_lea.vmem [#allocation6], 48
    %v82 = vld [vmem:[%s81] sm:$0xff]
    %v83 = vld [vmem:[%s81 + $0x8] sm:$0xff]
    %s84 = sld [smem:[#allocation2 + $0x3]]
    %v85 = vstv %s84
    %v86 = vmul.f32 %v85, %v82
    %v87 = vmul.f32 %v85, %v83
    %v88 = vadd.f32 %v73, %v86
    %v89 = vadd.f32 %v74, %v87
    %s90 = sld [smem:[#allocation2 + $0x83]]
    %v91 = vstv %s90
    %v92 = vmul.f32 %v91, %v82
    %v93 = vmul.f32 %v91, %v83
    %v94 = vadd.f32 %v79, %v92
    %v95 = vadd.f32 %v80, %v93
    %vm96 = vcmask 130048
    %97 = vst.msk [vmem:[#allocation7] sm:$0xff] %vm96, %v88
    %98 = vst.msk [vmem:[#allocation7 + $0x8] sm:$0xff] %vm96, %v89
    %s99 = scalar_lea.vmem [#allocation7], 16
    %100 = vst.msk [vmem:[%s99] sm:$0xff] %vm96, %v94
    %101 = vst.msk [vmem:[%s99 + $0x8] sm:$0xff] %vm96, %v95
    // Predicated region
    $region18: #{tpu_custom_call.1} parent=1 // pred_check
      _
    $region19: #{tpu_custom_call.1} parent=1 // pred_check_branch
      %103 = sbr.rel (0) target = $region21
    $region20: #{tpu_custom_call.1} parent=1 // pred_region
      %105 = vsyncadd [#allocation4], 0
      %s106 = sshll.u32 [#allocation7], 4
      %s107 = int_to_ptr.vmem [resolvable:$true] %s106
      %s108 = sshll.u32 %s2, 4
      %s109 = int_to_ptr.hbm [resolvable:$true] %s108
      %114 = dma.vmem_to_hbm [thread:$0]  %s107, 512, %s109, [#allocation4], 128, 128, 8
    $region21: #{tpu_custom_call.1} parent=1 // pred_fallthru
      _
    // Predicated region
    $region22: #{tpu_custom_call.1} parent=1 // pred_check
      _
    $region23: #{tpu_custom_call.1} parent=1 // pred_check_branch
      %116 = sbr.rel (0) target = $region25
    $region24: #{tpu_custom_call.1} parent=1 // pred_region
      %118 = dma.done [#allocation4], 512
    $region25: #{tpu_custom_call.1} parent=1 // pred_fallthru
      _
    %119 = vsyncpa [#allocation3], 1
    %120 = vsyncpa [#allocation4], 1
    %121 = vsyncpa [#allocation5], 1

</llo_original>
